<compile_context>
chip_gen: v5e
topology: v5e:2x2
jax: 0.10.0
libtpu: 0.0.40
codegen_flags: <defaults>
</compile_context>

<pallas_src>
import jax
import jax.numpy as jnp
from jax.experimental import pallas as pl
from jax.experimental.pallas import tpu as pltpu

LANE = 128       # vreg lane width (last axis) -- N-axis padding granularity.
                 # NOTE: for large, MXU-bound hidden/out dims, padding to 256
                 # fills the 256-wide v6e/v7x MXU better (128 is fine for v5e).
SUBLANE = 8      # vreg sublane width (second-to-last axis)
MAX_TM = 512     # max batch-tile rows (sweep 512 vs 1024 on v6e for huge batches)


def _round_up(n, m):
    return ((n + m - 1) // m) * m


def _sigmoid(z):
    # sigmoid(z) == 0.5 * (1 + tanh(z / 2)): one EUP transcendental per element
    # instead of exp + divide; mathematically identical to jax.nn.sigmoid.
    return 0.5 * (1.0 + jnp.tanh(0.5 * z))


def mlp_kernel(x_ref, w1_ref, b1_ref, w2_ref, b2_ref, o_ref):
    # Cast activations to the (bf16) weight dtype in VMEM (MXU-native on all
    # three generations); accumulate in f32; add f32 biases post-accumulate.
    x = x_ref[...].astype(w1_ref.dtype)
    h = jnp.dot(x, w1_ref[...], preferred_element_type=jnp.float32) + b1_ref[...]
    h = _sigmoid(h)
    # Zero-padded hidden columns become sigmoid(0)=0.5, but the matching rows
    # of the padded W2 are zero, so they contribute nothing to the 2nd matmul.
    y = jnp.dot(h.astype(w2_ref.dtype), w2_ref[...],
                preferred_element_type=jnp.float32) + b2_ref[...]
    o_ref[...] = _sigmoid(y).astype(o_ref.dtype)


def prepare_params(w1, b1, w2, b2, weight_dtype=jnp.bfloat16):
    """One-time parameter prep (hoisted out of the forward path).

    nn.Linear stores weight as [out_features, in_features]; transpose to
    [in, out].  Only the output-feature (N) axes are zero-padded to a lane
    multiple; contraction (K) axes stay unpadded -- the MXU pads K internally
    and this avoids padding x at call time.  Weights are cast to bf16
    (MXU-native); biases stay f32 (added after the f32 accumulate).
    """
    hid_size, in_size = w1.shape
    out_size = w2.shape[0]

    hid_p = _round_up(hid_size, LANE)
    out_p = _round_up(out_size, LANE)

    w1_p = jnp.zeros((in_size, hid_p), weight_dtype).at[:, :hid_size].set(
        w1.T.astype(weight_dtype))
    b1_p = jnp.zeros((1, hid_p), jnp.float32).at[0, :hid_size].set(b1)
    w2_p = jnp.zeros((hid_p, out_p), weight_dtype).at[:hid_size, :out_size].set(
        w2.T.astype(weight_dtype))
    b2_p = jnp.zeros((1, out_p), jnp.float32).at[0, :out_size].set(b2)
    return w1_p, b1_p, w2_p, b2_p


def mlp_forward(x, w1_p, b1_p, w2_p, b2_p, out_size):
    """x: [B, in_features]; padded params from prepare_params()."""
    batch, in_size = x.shape
    assert in_size == w1_p.shape[0]
    hid_p = w1_p.shape[1]
    out_p = w2_p.shape[1]

    # Batch tiling: pad only to a sublane multiple, then split into >= 2 tiles
    # (so the "parallel" axis can shard across v7x's two TensorCores) while
    # keeping each tile <= MAX_TM rows.  Worst-case row padding is < one tile.
    b8 = _round_up(batch, SUBLANE)
    n_tiles = max(pl.cdiv(b8, MAX_TM), 2 if b8 > SUBLANE else 1)
    tm = _round_up(pl.cdiv(b8, n_tiles), SUBLANE)
    b_pad = n_tiles * tm

    # No K padding of x; row padding only when the batch is not tile-aligned.
    x_in = x if b_pad == batch else jnp.pad(x, ((0, b_pad - batch), (0, 0)))

    w_bytes = jnp.dtype(w1_p.dtype).itemsize
    x_bytes = jnp.dtype(x.dtype).itemsize
    weight_bytes = (in_size * hid_p + hid_p * out_p) * w_bytes + (hid_p + out_p) * 4

    # The weight/bias block index never changes across the grid, so
    # double-buffering them only wastes VMEM.  Single-buffer them once they are
    # big enough to matter (v7x has only 64 MiB VMEM); at toy sizes leave the
    # default pipelining untouched.
    single_buffer_params = weight_bytes > (1 << 20)

    def const_spec(shape):
        if single_buffer_params:
            return pl.BlockSpec(shape, lambda i: (0, 0), pipeline_mode=pl.Buffered(1))
        return pl.BlockSpec(shape, lambda i: (0, 0))

    # Explicit VMEM budget: params (single- or double-buffered) + pipelined
    # x / out tiles.  Only override the compiler default when the footprint
    # would not fit the most conservative default scoped limit (16 MiB, v5e).
    param_bufs = 1 if single_buffer_params else 2
    vmem_bytes = (weight_bytes * param_bufs
                  + 2 * tm * in_size * x_bytes       # x tiles (double-buffered)
                  + 2 * tm * out_p * x_bytes)        # out tiles (double-buffered)
    vmem_limit = None
    if vmem_bytes > (12 << 20):
        vmem_limit = min(int(vmem_bytes * 3 // 2) + (4 << 20), 100 << 20)

    out_padded = pl.pallas_call(
        mlp_kernel,
        out_shape=jax.ShapeDtypeStruct((b_pad, out_p), x.dtype),
        grid_spec=pltpu.PrefetchScalarGridSpec(
            num_scalar_prefetch=0,
            grid=(n_tiles,),
            in_specs=[
                pl.BlockSpec((tm, in_size), lambda i: (i, 0)),  # x tile (pipelined)
                const_spec((in_size, hid_p)),                   # W1 (resident)
                const_spec((1, hid_p)),                         # b1 (resident)
                const_spec((hid_p, out_p)),                     # W2 (resident)
                const_spec((1, out_p)),                         # b2 (resident)
            ],
            out_specs=pl.BlockSpec((tm, out_p), lambda i: (i, 0)),  # lane-dense out
        ),
        compiler_params=pltpu.CompilerParams(
            dimension_semantics=("parallel",),     # batch tiles are independent
            vmem_limit_bytes=vmem_limit,
        ),
    )(x_in, w1_p, b1_p, w2_p, b2_p)

    # Strip batch/lane padding.
    # TODO(synk): skip this slice (an extra HBM pass over the output) when the
    # consumer can accept the lane-padded buffer directly.
    return out_padded[:batch, :out_size]


def reference_forward(x, w1, b1, w2, b2):
    h = jax.nn.sigmoid(x @ w1.T + b1)
    return jax.nn.sigmoid(h @ w2.T + b2)


if __name__ == "__main__":
    input_size, hidden_size, output_size = 2, 2, 1

    # Deterministic parameter init (same shapes as nn.Linear in the module).
    key = jax.random.PRNGKey(0)
    k1, k2, k3, k4, k5 = jax.random.split(key, 5)
    bound1 = 1.0 / (input_size ** 0.5)
    bound2 = 1.0 / (hidden_size ** 0.5)
    w1 = jax.random.uniform(k1, (hidden_size, input_size), jnp.float32, -bound1, bound1)
    b1 = jax.random.uniform(k2, (hidden_size,), jnp.float32, -bound1, bound1)
    w2 = jax.random.uniform(k3, (output_size, hidden_size), jnp.float32, -bound2, bound2)
    b2 = jax.random.uniform(k4, (output_size,), jnp.float32, -bound2, bound2)

    # One-time parameter prep (transpose + N-axis lane padding + bf16 cast).
    w1_p, b1_p, w2_p, b2_p = prepare_params(w1, b1, w2, b2)

    # Same XOR-style input as the PyTorch script: [4, 2] float32.
    x = jnp.array([[0, 0], [0, 1], [1, 0], [1, 1]], dtype=jnp.float32)
    out = jax.block_until_ready(mlp_forward(x, w1_p, b1_p, w2_p, b2_p, output_size))
    ref = reference_forward(x, w1, b1, w2, b2)
    assert out.shape == (4, 1)
    # bf16 weights / activations with f32 accumulate: tolerance vs f32 reference.
    assert jnp.allclose(out, ref, atol=1e-2, rtol=0.0)

    # Second check: exercises the multi-tile batch grid (2 grid steps) and the
    # row-padding path with a non-aligned batch.
    x2 = jax.random.uniform(k5, (24, input_size), jnp.float32)
    out2 = jax.block_until_ready(mlp_forward(x2, w1_p, b1_p, w2_p, b2_p, output_size))
    ref2 = reference_forward(x2, w1, b1, w2, b2)
    assert out2.shape == (24, 1)
    assert jnp.allclose(out2, ref2, atol=1e-2, rtol=0.0)

    print("KERNEL_OK")
</pallas_src>

<mosaic_0001>
module attributes {stable_mosaic.version = 11 : i64} {
  func.func @mlp_kernel(%arg0: i32, %arg1: memref<8x2xf32, #tpu.memory_space<vmem>>, %arg2: memref<2x128xbf16, #tpu.memory_space<vmem>>, %arg3: memref<1x128xf32, #tpu.memory_space<vmem>>, %arg4: memref<128x128xbf16, #tpu.memory_space<vmem>>, %arg5: memref<1x128xf32, #tpu.memory_space<vmem>>, %arg6: memref<8x128xf32, #tpu.memory_space<vmem>>) attributes {dimension_semantics = [#tpu.dimension_semantics<parallel>], iteration_bounds = array<i64: 1>, scalar_prefetch = 0 : i64, scratch_operands = 0 : i64, tpu.core_type = #tpu.core_type<tc>, window_params = [{transform_indices = @transform_0, window_bounds = array<i64: 8, 2>}, {pipeline_mode = #tpu.pipeline_mode<synchronous>, transform_indices = @transform_1, window_bounds = array<i64: 2, 128>}, {pipeline_mode = #tpu.pipeline_mode<synchronous>, transform_indices = @transform_2, window_bounds = array<i64: 1, 128>}, {pipeline_mode = #tpu.pipeline_mode<synchronous>, transform_indices = @transform_3, window_bounds = array<i64: 128, 128>}, {pipeline_mode = #tpu.pipeline_mode<synchronous>, transform_indices = @transform_4, window_bounds = array<i64: 1, 128>}, {transform_indices = @transform_5, window_bounds = array<i64: 8, 128>}]} {
    %c0 = arith.constant 0 : index
    %c0_0 = arith.constant 0 : index
    %0 = vector.load %arg1[%c0, %c0_0] : memref<8x2xf32, #tpu.memory_space<vmem>>, vector<8x2xf32>
    %1 = arith.truncf %0 : vector<8x2xf32> to vector<8x2xbf16>
    %c0_1 = arith.constant 0 : index
    %c0_2 = arith.constant 0 : index
    %2 = vector.load %arg2[%c0_1, %c0_2] : memref<2x128xbf16, #tpu.memory_space<vmem>>, vector<2x128xbf16>
    %cst = arith.constant dense<0.000000e+00> : vector<8x128xf32>
    %3 = tpu.matmul %1, %2, %cst {dimension_numbers = #tpu.dot_dimension_numbers<[1], [0], [0], [1], [0, 0, 1, 1], [], []>} : vector<8x2xbf16>, vector<2x128xbf16>, vector<8x128xf32> -> vector<8x128xf32>
    %c0_3 = arith.constant 0 : index
    %c0_4 = arith.constant 0 : index
    %4 = vector.load %arg3[%c0_3, %c0_4] : memref<1x128xf32, #tpu.memory_space<vmem>>, vector<1x128xf32>
    %5 = vector.broadcast %4 : vector<1x128xf32> to vector<8x128xf32>
    %6 = arith.addf %3, %5 : vector<8x128xf32>
    %cst_5 = arith.constant 5.000000e-01 : f32
    %7 = vector.broadcast %cst_5 : f32 to vector<8x128xf32>
    %8 = arith.mulf %7, %6 : vector<8x128xf32>
    %9 = math.tanh %8 : vector<8x128xf32>
    %cst_6 = arith.constant 1.000000e+00 : f32
    %10 = vector.broadcast %cst_6 : f32 to vector<8x128xf32>
    %11 = arith.addf %10, %9 : vector<8x128xf32>
    %cst_7 = arith.constant 5.000000e-01 : f32
    %12 = vector.broadcast %cst_7 : f32 to vector<8x128xf32>
    %13 = arith.mulf %12, %11 : vector<8x128xf32>
    %14 = arith.truncf %13 : vector<8x128xf32> to vector<8x128xbf16>
    %c0_8 = arith.constant 0 : index
    %c0_9 = arith.constant 0 : index
    %15 = vector.load %arg4[%c0_8, %c0_9] : memref<128x128xbf16, #tpu.memory_space<vmem>>, vector<128x128xbf16>
    %cst_10 = arith.constant dense<0.000000e+00> : vector<8x128xf32>
    %16 = tpu.matmul %14, %15, %cst_10 {dimension_numbers = #tpu.dot_dimension_numbers<[1], [0], [0], [1], [0, 0, 1, 1], [], []>} : vector<8x128xbf16>, vector<128x128xbf16>, vector<8x128xf32> -> vector<8x128xf32>
    %c0_11 = arith.constant 0 : index
    %c0_12 = arith.constant 0 : index
    %17 = vector.load %arg5[%c0_11, %c0_12] : memref<1x128xf32, #tpu.memory_space<vmem>>, vector<1x128xf32>
    %18 = vector.broadcast %17 : vector<1x128xf32> to vector<8x128xf32>
    %19 = arith.addf %16, %18 : vector<8x128xf32>
    %cst_13 = arith.constant 5.000000e-01 : f32
    %20 = vector.broadcast %cst_13 : f32 to vector<8x128xf32>
    %21 = arith.mulf %20, %19 : vector<8x128xf32>
    %22 = math.tanh %21 : vector<8x128xf32>
    %cst_14 = arith.constant 1.000000e+00 : f32
    %23 = vector.broadcast %cst_14 : f32 to vector<8x128xf32>
    %24 = arith.addf %23, %22 : vector<8x128xf32>
    %cst_15 = arith.constant 5.000000e-01 : f32
    %25 = vector.broadcast %cst_15 : f32 to vector<8x128xf32>
    %26 = arith.mulf %25, %24 : vector<8x128xf32>
    %c0_16 = arith.constant 0 : index
    %c0_17 = arith.constant 0 : index
    %27 = vector.load %arg6[%c0_16, %c0_17] : memref<8x128xf32, #tpu.memory_space<vmem>>, vector<8x128xf32>
    tpu.vector_store %arg6[%c0_16, %c0_17], %26 {strides = array<i32>} : memref<8x128xf32, #tpu.memory_space<vmem>>, vector<8x128xf32>,
    return
  }
  func.func @transform_0(%arg0: i32) -> (i32, i32) {
    %c0_i32 = arith.constant 0 : i32
    %c0_i32_0 = arith.constant 0 : i32
    return %arg0, %c0_i32 : i32, i32
  }
  func.func @transform_1(%arg0: i32) -> (i32, i32) {
    %c0_i32 = arith.constant 0 : i32
    %c0_i32_0 = arith.constant 0 : i32
    %c0_i32_1 = arith.constant 0 : i32
    return %c0_i32, %c0_i32_0 : i32, i32
  }
  func.func @transform_2(%arg0: i32) -> (i32, i32) {
    %c0_i32 = arith.constant 0 : i32
    %c0_i32_0 = arith.constant 0 : i32
    %c0_i32_1 = arith.constant 0 : i32
    return %c0_i32, %c0_i32_0 : i32, i32
  }
  func.func @transform_3(%arg0: i32) -> (i32, i32) {
    %c0_i32 = arith.constant 0 : i32
    %c0_i32_0 = arith.constant 0 : i32
    %c0_i32_1 = arith.constant 0 : i32
    return %c0_i32, %c0_i32_0 : i32, i32
  }
  func.func @transform_4(%arg0: i32) -> (i32, i32) {
    %c0_i32 = arith.constant 0 : i32
    %c0_i32_0 = arith.constant 0 : i32
    %c0_i32_1 = arith.constant 0 : i32
    return %c0_i32, %c0_i32_0 : i32, i32
  }
  func.func @transform_5(%arg0: i32) -> (i32, i32) {
    %c0_i32 = arith.constant 0 : i32
    %c0_i32_0 = arith.constant 0 : i32
    return %arg0, %c0_i32 : i32, i32
  }
}

</mosaic_0001>

<llo_original>
// kernel: tpu_custom_call.1
$region0: #{tpu_custom_call.1}
  #allocation0 [shape = 'u32[]', space=smem, size = 0x4, offset = 0x4, fixed_abs, tag = 'smem constant byte address 0x4 - core index']
  #allocation1 [shape = 'u32[72,128]{1,0:T(1,128)}', space=vmem, size = 0x9000, scoped, tag = 'internal scratch']
  %s0 = inlined_call_operand.vmem [shape: f32[8,2], index: 0, kind: input, shape index: {}]
  %s1 = inlined_call_operand.vmem [shape: bf16[2,128], index: 1, kind: input, shape index: {}]
  %s2 = inlined_call_operand.vmem [shape: f32[1,128], index: 2, kind: input, shape index: {}]
  %s3 = inlined_call_operand.hbm [shape: bf16[128,128], index: 3, kind: input, shape index: {}]
  %s4 = inlined_call_operand.vmem [shape: f32[1,128], index: 4, kind: input, shape index: {}]
  %s5 = inlined_call_operand.hbm [shape: f32[8,128], index: 5, kind: output, shape index: {}]
  %s6 = sld [smem:[#allocation0]]
  $region34: #{tpu_custom_call.1} parent=0
    _
  %s8 = ssub.s32 1, %s6
  %s9 = scalar_select 0, %s8, %s6
  $region1: #{tpu_custom_call.1} parent=0
    #allocation2 [shape = 'u8[32768]{0}', space=vmem, size = 0x8000, scoped, tag = 'input window, operand 3, single buffered']
    #allocation3 [shape = 's32[1]{0}', space=sflag, size = 0x4, scoped, tag = 'scoped memory for tpu_custom_call.1']
    #allocation4 [shape = 's32[1]{0}', space=sflag, size = 0x4, scoped, tag = 'scoped memory for tpu_custom_call.1']
    #allocation5 [shape = 'u8[4096]{0}', space=vmem, size = 0x1000, scoped, tag = 'output window, operand 0, single buffered']
    %10 = vsyncpa [#allocation3], 0
    %11 = vsyncpa [#allocation4], 0
    // Predicated region
    $region2: #{tpu_custom_call.1} parent=1 // pred_check
      _
    $region3: #{tpu_custom_call.1} parent=1 // pred_check_branch
      %13 = sbr.rel (0) target = $region5
    $region4: #{tpu_custom_call.1} parent=1 // pred_region
      _
    $region5: #{tpu_custom_call.1} parent=1 // pred_fallthru
      _
    // Predicated region
    $region6: #{tpu_custom_call.1} parent=1 // pred_check
      _
    $region7: #{tpu_custom_call.1} parent=1 // pred_check_branch
      %15 = sbr.rel (0) target = $region9
    $region8: #{tpu_custom_call.1} parent=1 // pred_region
      _
    $region9: #{tpu_custom_call.1} parent=1 // pred_fallthru
      _
    // Predicated region
    $region10: #{tpu_custom_call.1} parent=1 // pred_check
      _
    $region11: #{tpu_custom_call.1} parent=1 // pred_check_branch
      %17 = sbr.rel (0) target = $region13
    $region12: #{tpu_custom_call.1} parent=1 // pred_region
      _
    $region13: #{tpu_custom_call.1} parent=1 // pred_fallthru
      _
    // Predicated region
    $region14: #{tpu_custom_call.1} parent=1 // pred_check
      _
    $region15: #{tpu_custom_call.1} parent=1 // pred_check_branch
      %19 = sbr.rel (0) target = $region17
    $region16: #{tpu_custom_call.1} parent=1 // pred_region
      %21 = vsyncadd [#allocation3], 0
      %s22 = sshll.u32 %s3, 4
      %s23 = int_to_ptr.hbm [resolvable:$true] %s22
      %s24 = sshll.u32 [#allocation2], 4
      %s25 = int_to_ptr.vmem [resolvable:$true] %s24
      %30 = dma.hbm_to_vmem [thread:$0]  %s23, 1024, %s25, [#allocation3], 64, 64, 4
    $region17: #{tpu_custom_call.1} parent=1 // pred_fallthru
      _
    // Predicated region
    $region18: #{tpu_custom_call.1} parent=1 // pred_check
      _
    $region19: #{tpu_custom_call.1} parent=1 // pred_check_branch
      %32 = sbr.rel (0) target = $region21
    $region20: #{tpu_custom_call.1} parent=1 // pred_region
      _
    $region21: #{tpu_custom_call.1} parent=1 // pred_fallthru
      _
    // Predicated region
    $region22: #{tpu_custom_call.1} parent=1 // pred_check
      _
    $region23: #{tpu_custom_call.1} parent=1 // pred_check_branch
      %34 = sbr.rel (0) target = $region25
    $region24: #{tpu_custom_call.1} parent=1 // pred_region
      %36 = dma.done [#allocation3], 1024
    $region25: #{tpu_custom_call.1} parent=1 // pred_fallthru
      _
    %v38 = vld [vmem:[%s0] sm:$0xff]
    %v39 = vpack.c.bf16 %v38, %v38
    %v40 = vld [vmem:[%s1] sm:$0x1]
    %v41 = vld [vmem:[%s2] sm:$0x1]
    %v43 = vperm.slane %v41, 0
    %vm45 = vcmask 15360
    %v47 = vsel %vm45, %v39, 0
    %vm49 = vcmask 1040384
    %v51 = vsel %vm49, %v40, 0
    %53 = vmatpush.bf16.msra.mxu0 0
    %54 = vmatpush.bf16.msra.mxu0 0
    %55 = vmatpush.bf16.msra.mxu0 0
    %56 = vmatpush.bf16.msra.mxu0 0
    %57 = vmatpush.bf16.msra.mxu0 0
    %58 = vmatpush.bf16.msra.mxu0 0
    %59 = vmatpush.bf16.msra.mxu0 0
    %60 = vmatpush.bf16.msra.mxu0 %v51
    %61 = vmatmul.bf16.gmra.mxu0 %v47
    %v62 = vpop.f32.mrf.mxu0
    %v63 = vadd.f32 %v43, %v62
    %v64 = vpop.f32.mrf.mxu0
    %65 = vdwg.mxu0
    %v66 = vmul.f32 %v63, 0.5
    %v67 = vtanh.pop %v66
    %v68 = vadd.f32 %v67, 1.0
    %v69 = vmul.f32 %v68, 0.5
    %v70 = vpack.c.bf16 %v69, %v69
    %v71 = vld [vmem:[#allocation2] sm:$0xf]
    %v72 = vld [vmem:[#allocation2 + $0x4] sm:$0xf]
    %v73 = vld [vmem:[#allocation2 + $0x8] sm:$0xf]
    %v74 = vld [vmem:[#allocation2 + $0xc] sm:$0xf]
    %v75 = vld [vmem:[#allocation2 + $0x10] sm:$0xf]
    %v76 = vld [vmem:[#allocation2 + $0x14] sm:$0xf]
    %v77 = vld [vmem:[#allocation2 + $0x18] sm:$0xf]
    %v78 = vld [vmem:[#allocation2 + $0x1c] sm:$0xf]
    %v79 = vld [vmem:[#allocation2 + $0x20] sm:$0xf]
    %v80 = vld [vmem:[#allocation2 + $0x24] sm:$0xf]
    %v81 = vld [vmem:[#allocation2 + $0x28] sm:$0xf]
    %v82 = vld [vmem:[#allocation2 + $0x2c] sm:$0xf]
    %v83 = vld [vmem:[#allocation2 + $0x30] sm:$0xf]
    %v84 = vld [vmem:[#allocation2 + $0x34] sm:$0xf]
    %v85 = vld [vmem:[#allocation2 + $0x38] sm:$0xf]
    %v86 = vld [vmem:[#allocation2 + $0x3c] sm:$0xf]
    %v87 = vld [vmem:[%s4] sm:$0x1]
    %v89 = vperm.slane %v87, 0
    %v107 = vunpack.c.l.b16 %v71
    %v108 = vunpack.c.l.b16 %v72
    %v109 = vunpack.c.l.b16 %v73
    %v110 = vunpack.c.l.b16 %v74
    %v111 = vunpack.c.l.b16 %v75
    %v112 = vunpack.c.l.b16 %v76
    %v113 = vunpack.c.l.b16 %v77
    %v114 = vunpack.c.l.b16 %v78
    %v115 = vunpack.c.l.b16 %v79
    %v116 = vunpack.c.l.b16 %v80
    %v117 = vunpack.c.l.b16 %v81
    %v118 = vunpack.c.l.b16 %v82
    %v119 = vunpack.c.l.b16 %v83
    %v120 = vunpack.c.l.b16 %v84
    %v121 = vunpack.c.l.b16 %v85
    %v122 = vunpack.c.l.b16 %v86
    %v123 = vpack.c.b16 %v108, %v107
    %v124 = vpack.c.b16 %v110, %v109
    %v125 = vpack.c.b16 %v112, %v111
    %v126 = vpack.c.b16 %v114, %v113
    %v127 = vpack.c.b16 %v116, %v115
    %v128 = vpack.c.b16 %v118, %v117
    %v129 = vpack.c.b16 %v120, %v119
    %v130 = vpack.c.b16 %v122, %v121
    %139 = vmatpush.bf16.msra.mxu0 %v130
    %140 = vmatpush.bf16.msra.mxu0 %v129
    %141 = vmatpush.bf16.msra.mxu0 %v128
    %142 = vmatpush.bf16.msra.mxu0 %v127
    %143 = vmatpush.bf16.msra.mxu0 %v126
    %144 = vmatpush.bf16.msra.mxu0 %v125
    %145 = vmatpush.bf16.msra.mxu0 %v124
    %146 = vmatpush.bf16.msra.mxu0 %v123
    %147 = vmatmul.bf16.gmra.mxu0 %v70
    %v148 = vpop.f32.mrf.mxu0
    %v149 = vadd.f32 %v89, %v148
    %v150 = vpop.f32.mrf.mxu0
    %151 = vdwg.mxu0
    %v152 = vmul.f32 %v149, 0.5
    %v153 = vtanh.pop %v152
    %v154 = vadd.f32 %v153, 1.0
    %v155 = vmul.f32 %v154, 0.5
    %156 = vst [vmem:[#allocation5] sm:$0xff] %v155
    // Predicated region
    $region26: #{tpu_custom_call.1} parent=1 // pred_check
      _
    $region27: #{tpu_custom_call.1} parent=1 // pred_check_branch
      %158 = sbr.rel (0) target = $region29
    $region28: #{tpu_custom_call.1} parent=1 // pred_region
      %160 = vsyncadd [#allocation4], 0
      %s162 = sshll.u32 [#allocation5], 4
      %s163 = int_to_ptr.vmem [resolvable:$true] %s162
      %s164 = sshll.u32 %s5, 4
      %s165 = int_to_ptr.hbm [resolvable:$true] %s164
      %167 = dma.vmem_to_hbm [thread:$0]  %s163, 128, %s165, [#allocation4]
    $region29: #{tpu_custom_call.1} parent=1 // pred_fallthru
      _
    // Predicated region
    $region30: #{tpu_custom_call.1} parent=1 // pred_check
      _
    $region31: #{tpu_custom_call.1} parent=1 // pred_check_branch
      %169 = sbr.rel (0) target = $region33
    $region32: #{tpu_custom_call.1} parent=1 // pred_region
      %171 = dma.done [#allocation4], 128
    $region33: #{tpu_custom_call.1} parent=1 // pred_fallthru
      _
    %172 = vsyncpa [#allocation3], 1
    %173 = vsyncpa [#allocation4], 1

</llo_original>
